<compile_context>
chip_gen: v7x
topology: tpu7x:2x2x1
jax: 0.10.0
libtpu: 0.0.40
codegen_flags: <defaults>
</compile_context>

<pallas_src>
import functools

import jax
import jax.numpy as jnp
import numpy as np
from jax.experimental import pallas as pl
from jax.experimental.pallas import tpu as pltpu


def _round_up(x, m):
    return ((x + m - 1) // m) * m


def _vmem_capacity_bytes():
    try:
        return int(pltpu.get_tpu_info().vmem_capacity_bytes)
    except Exception:
        return 64 * 1024 * 1024  # conservative (v7x) default


# --------------------------------------------------------------------------- #
# Kernel
# --------------------------------------------------------------------------- #
def _attention_kernel(proj_ref, enc_ref, out_ref, *, s_actual, s_pad, ts, num_s):
    # proj_ref: (B, H)      float32, tiny, constant block index (resident)
    # enc_ref:  (ts, B, H)  streamed dtype (f32/bf16), one contiguous HBM slab per step
    # out_ref:  (s_pad, B)  float32, VMEM-resident across the S grid axis
    s_idx = pl.program_id(0)

    # energy[s, b] = sum_h enc[s, b, h] * proj[b, h]  (f32 products + f32 accumulation)
    prod = enc_ref[...].astype(jnp.float32) * proj_ref[...][None, :, :]
    e = jnp.sum(prod, axis=-1)                       # (ts, B) f32

    if num_s == 1:
        out_ref[...] = e                             # full-block store (ts == S == s_pad)
    else:
        start = pl.multiple_of(s_idx * ts, ts)       # ts is a multiple of 8 here
        out_ref[pl.ds(start, ts), :] = e

    # Masked, numerically-stable softmax over the full resident sequence axis.
    @pl.when(s_idx == num_s - 1)
    def _finalize():
        energy = out_ref[...]                        # (s_pad, B) f32
        if s_pad != s_actual:                        # ragged last tile -> mask pad rows
            row = jax.lax.broadcasted_iota(jnp.int32, energy.shape, 0)
            energy = jnp.where(row < s_actual, energy, -jnp.inf)
        m = jnp.max(energy, axis=0, keepdims=True)   # (1, B)
        p = jnp.exp(energy - m)
        denom = jnp.sum(p, axis=0, keepdims=True)    # (1, B)
        inv = pl.reciprocal(denom, approx=True)      # EUP slot, not a VALU divide
        inv = inv * (2.0 - denom * inv)              # one Newton step -> ~f32 exact
        out_ref[...] = p * inv


# --------------------------------------------------------------------------- #
# Tiling plan (per-generation VMEM budget)
# --------------------------------------------------------------------------- #
def _plan_tiles(S, B, H, itemsize, vmem_cap, tile_rows=None):
    """Return (ts, num_s, s_pad, nbuf, vmem_limit_bytes) or None (=> XLA path)."""
    sub_in = max(8, 32 // itemsize)                      # sublane packing of streamed dtype
    lane_h = _round_up(H, 128)
    row_hbm = B * H * itemsize                           # HBM bytes per sequence row
    row_vmem = _round_up(B, sub_in) * lane_h * itemsize  # VMEM bytes per enc-tile row
    row_f32 = _round_up(B, 8) * lane_h * 4               # f32 intermediate allowance per row
    out_row = _round_up(B, 128) * 4                      # VMEM bytes per resident output row
    proj_vmem = _round_up(B, 8) * lane_h * 4
    budget = int(0.85 * vmem_cap) - (4 << 20)            # slack for compiler-internal scratch

    def cost(ts, nbuf):
        num_s = -(-S // ts)
        s_pad = num_s * ts if num_s > 1 else S
        needed = (nbuf * ts * row_vmem                    # streamed enc buffers
                  + 2 * ts * row_f32                      # elementwise/reduce temporaries
                  + 2 * _round_up(s_pad, 8) * out_row     # resident f32 energies (x2 safety)
                  + 2 * proj_vmem)
        return num_s, s_pad, needed

    # Target ~8 MiB of HBM per grid step (amortizes the ~0.35 us step overhead).
    ts = min(S, max(8, (8 << 20) // max(row_hbm, 1)))
    if tile_rows is not None:
        ts = min(S, max(8, (int(tile_rows) // 8) * 8))
    if ts < S:
        ts = max(8, (ts // 8) * 8)

    while True:
        num_s, s_pad, needed = cost(ts, 2)
        if needed <= budget:
            break
        if ts <= 8:
            return None                                   # resident-energy design won't fit
        ts = max(8, (((ts + 1) // 2) // 8) * 8)

    nbuf = 2
    if num_s > 3 and ts * row_hbm < (2 << 20):            # tiny tiles: keep a 3rd DMA in flight
        n3, p3, need3 = cost(ts, 3)
        if need3 <= budget:
            nbuf, num_s, s_pad, needed = 3, n3, p3, need3

    vmem_limit = min(max(needed + (4 << 20), 32 << 20), int(0.95 * vmem_cap))
    vmem_limit = max(vmem_limit, needed)
    return ts, num_s, s_pad, nbuf, int(vmem_limit)


# --------------------------------------------------------------------------- #
# pallas_call wrapper
# --------------------------------------------------------------------------- #
def _run_pallas(proj_f32, enc, *, S, B, H, ts, num_s, s_pad, nbuf, vmem_limit):
    itemsize = enc.dtype.itemsize
    kernel = functools.partial(_attention_kernel,
                               s_actual=S, s_pad=s_pad, ts=ts, num_s=num_s)

    enc_index_map = lambda s: (s, 0, 0)
    if nbuf > 2:
        enc_spec = pl.BlockSpec((ts, B, H), enc_index_map,
                                pipeline_mode=pl.Buffered(nbuf))
    else:
        enc_spec = pl.BlockSpec((ts, B, H), enc_index_map)

    out_bytes = s_pad * B * 4
    return pl.pallas_call(
        kernel,
        out_shape=jax.ShapeDtypeStruct((s_pad, B), jnp.float32),
        grid_spec=pltpu.PrefetchScalarGridSpec(
            num_scalar_prefetch=0,
            grid=(num_s,),
            in_specs=[
                pl.BlockSpec((B, H), lambda s: (0, 0)),       # proj: tiny, resident
                enc_spec,                                     # enc: big contiguous tiles
            ],
            out_specs=pl.BlockSpec((s_pad, B), lambda s: (0, 0)),  # resident across S tiles
        ),
        compiler_params=pltpu.CompilerParams(
            dimension_semantics=("arbitrary",),   # output block is resident across this axis
            vmem_limit_bytes=int(vmem_limit),
        ),
        cost_estimate=pl.CostEstimate(
            flops=2 * S * B * H + 5 * s_pad * B,
            transcendentals=s_pad * B + B,
            bytes_accessed=int(S * B * H * itemsize + B * H * 4 + 2 * out_bytes)),
    )(proj_f32, enc)


def bahdanau_attention(encoder_output, last_decoder_state, weight, bias, *,
                       stream_dtype=None, prefer_pallas=None, tile_rows=None):
    """encoder_output: [S, B, H]; last_decoder_state: [2, 1, B, H];
       weight: [H, H] (nn.Linear weight, [out, in]); bias: [H].
       Returns softmax attention weights with shape [1, 1, S, B] (float32)."""
    S, B, H = encoder_output.shape

    # Hoisted nn.Linear (tiny; XLA handles it, keeps the [H,H] weight out of VMEM).
    state = last_decoder_state[0, 0].astype(jnp.float32)                      # [B, H]
    proj = state @ weight.astype(jnp.float32).T + bias.astype(jnp.float32)    # [B, H] f32

    enc = encoder_output
    if stream_dtype is not None and enc.dtype != np.dtype(stream_dtype):
        # NOTE: a standalone cast is a full extra HBM pass; prefer producing bf16
        # encoder outputs upstream so the kernel streams them zero-copy.
        enc = enc.astype(stream_dtype)
    itemsize = enc.dtype.itemsize
    enc_bytes = S * B * H * itemsize

    use_pallas = prefer_pallas
    if use_pallas is None:
        # Small-problem fallback: fixed pallas_call/step overhead dwarfs the work.
        use_pallas = enc_bytes >= (256 << 10)

    plan = _plan_tiles(S, B, H, itemsize, _vmem_capacity_bytes(), tile_rows) if use_pallas else None
    if plan is None:
        # Pure-XLA path (tiny problems, or the resident-energy design does not fit VMEM).
        energies = jnp.einsum("sbh,bh->sb", enc.astype(jnp.float32), proj)
        return jax.nn.softmax(energies, axis=0)[None, None]

    ts, num_s, s_pad, nbuf, vmem_limit = plan
    kwargs = dict(S=S, B=B, H=H, ts=ts, num_s=num_s, s_pad=s_pad, vmem_limit=vmem_limit)
    if nbuf > 2:
        try:
            out = _run_pallas(proj, enc, nbuf=nbuf, **kwargs)
        except Exception:
            # pl.Buffered / pipeline_mode unavailable: fall back to default double-buffering.
            out = _run_pallas(proj, enc, nbuf=2, **kwargs)
    else:
        out = _run_pallas(proj, enc, nbuf=2, **kwargs)

    return out[:S][None, None]                   # [1, 1, S, B]


# --------------------------------------------------------------------------- #
# Pure-JAX reference
# --------------------------------------------------------------------------- #
def _reference(encoder_output, last_decoder_state, weight, bias):
    state = last_decoder_state[0, 0].astype(jnp.float32)
    proj = state @ weight.astype(jnp.float32).T + bias.astype(jnp.float32)
    energies = jnp.einsum("sbh,bh->sb", encoder_output.astype(jnp.float32), proj)
    return jax.nn.softmax(energies, axis=0)[None, None]


if __name__ == "__main__":
    # Demo shapes: seq_len=8, batch=2, hidden_size=32.
    S, B, H = 8, 2, 32

    key = jax.random.PRNGKey(0)
    k_enc, k_state, k_w, k_b = jax.random.split(key, 4)
    encoder_output = jax.random.normal(k_enc, (S, B, H), dtype=jnp.float32)
    last_decoder_state = jax.random.normal(k_state, (2, 1, B, H), dtype=jnp.float32)
    bound = 1.0 / float(np.sqrt(H))
    weight = jax.random.uniform(k_w, (H, H), jnp.float32, -bound, bound)
    bias = jax.random.uniform(k_b, (H,), jnp.float32, -bound, bound)

    ref = _reference(encoder_output, last_decoder_state, weight, bias)

    # 1) Pallas path, f32 streaming (single S tile).
    out = bahdanau_attention(encoder_output, last_decoder_state, weight, bias,
                             prefer_pallas=True)
    out = jax.block_until_ready(out)
    assert out.shape == (1, 1, S, B), out.shape
    assert jnp.allclose(out, ref, atol=1e-4, rtol=1e-4), "f32 Pallas mismatch vs reference"
    assert jnp.allclose(jnp.sum(out, axis=2), 1.0, atol=1e-4)

    # 2) Pallas path with bf16 encoder outputs fed directly (zero-copy bf16 streaming;
    #    proj, accumulation and softmax stay f32 inside the kernel).
    out_bf16 = bahdanau_attention(encoder_output.astype(jnp.bfloat16), last_decoder_state,
                                  weight, bias, prefer_pallas=True)
    out_bf16 = jax.block_until_ready(out_bf16)
    assert jnp.allclose(out_bf16, ref, atol=2e-2), "bf16 Pallas mismatch vs reference"

    # 3) Multi-tile path: ragged last S tile + small (triple-buffered) tiles.
    S2, B2, H2 = 1000, 2, 128
    k_enc2, k_state2, k_w2, k_b2 = jax.random.split(jax.random.PRNGKey(0), 4)
    enc2 = jax.random.normal(k_enc2, (S2, B2, H2), dtype=jnp.float32)
    dec2 = jax.random.normal(k_state2, (2, 1, B2, H2), dtype=jnp.float32)
    bound2 = 1.0 / float(np.sqrt(H2))
    w2 = jax.random.uniform(k_w2, (H2, H2), jnp.float32, -bound2, bound2)
    b2 = jax.random.uniform(k_b2, (H2,), jnp.float32, -bound2, bound2)
    ref2 = _reference(enc2, dec2, w2, b2)
    out2 = bahdanau_attention(enc2, dec2, w2, b2, prefer_pallas=True, tile_rows=128)
    out2 = jax.block_until_ready(out2)
    assert out2.shape == (1, 1, S2, B2), out2.shape
    assert jnp.allclose(out2, ref2, atol=1e-4, rtol=1e-4), "multi-tile Pallas mismatch"
    assert jnp.allclose(jnp.sum(out2, axis=2), 1.0, atol=1e-4)

    # 4) Auto small-problem fallback (pure XLA) still matches.
    out_auto = bahdanau_attention(encoder_output, last_decoder_state, weight, bias)
    out_auto = jax.block_until_ready(out_auto)
    assert jnp.allclose(out_auto, ref, atol=1e-5, rtol=1e-5)

    print("KERNEL_OK")
</pallas_src>

<mosaic_0001>
module attributes {stable_mosaic.version = 11 : i64} {
  func.func @_attention_kernel(%arg0: i32, %arg1: memref<2x32xf32, #tpu.memory_space<vmem>>, %arg2: memref<8x2x32xf32, #tpu.memory_space<vmem>>, %arg3: memref<8x2xf32, #tpu.memory_space<vmem>>) attributes {dimension_semantics = [#tpu.dimension_semantics<arbitrary>], iteration_bounds = array<i64: 1>, scalar_prefetch = 0 : i64, scratch_operands = 0 : i64, tpu.core_type = #tpu.core_type<tc>, window_params = [{pipeline_mode = #tpu.pipeline_mode<synchronous>, transform_indices = @transform_0, window_bounds = array<i64: 2, 32>}, {transform_indices = @transform_1, window_bounds = array<i64: 8, 2, 32>}, {pipeline_mode = #tpu.pipeline_mode<synchronous>, transform_indices = @transform_2, window_bounds = array<i64: 8, 2>}]} {
    %c0 = arith.constant 0 : index
    %c0_0 = arith.constant 0 : index
    %c0_1 = arith.constant 0 : index
    %0 = vector.load %arg2[%c0, %c0_0, %c0_1] : memref<8x2x32xf32, #tpu.memory_space<vmem>>, vector<8x2x32xf32>
    %c0_2 = arith.constant 0 : index
    %c0_3 = arith.constant 0 : index
    %1 = vector.load %arg1[%c0_2, %c0_3] : memref<2x32xf32, #tpu.memory_space<vmem>>, vector<2x32xf32>
    %2 = vector.shape_cast %1 : vector<2x32xf32> to vector<1x2x32xf32>
    %3 = vector.broadcast %2 : vector<1x2x32xf32> to vector<8x2x32xf32>
    %4 = arith.mulf %0, %3 : vector<8x2x32xf32>
    %cst = arith.constant dense<0.000000e+00> : vector<8x2xf32>
    %5 = vector.multi_reduction <add>, %4, %cst [2] : vector<8x2x32xf32> to vector<8x2xf32>
    %c0_4 = arith.constant 0 : index
    %c0_5 = arith.constant 0 : index
    %6 = vector.load %arg3[%c0_4, %c0_5] : memref<8x2xf32, #tpu.memory_space<vmem>>, vector<8x2xf32>
    tpu.vector_store %arg3[%c0_4, %c0_5], %5 {strides = array<i32>} : memref<8x2xf32, #tpu.memory_space<vmem>>, vector<8x2xf32>,
    %c0_i32 = arith.constant 0 : i32
    %7 = arith.cmpi eq, %arg0, %c0_i32 : i32
    %8 = arith.extui %7 : i1 to i32
    %c0_i32_6 = arith.constant 0 : i32
    %9 = arith.cmpi ne, %8, %c0_i32_6 : i32
    scf.if %9 {
      %c0_7 = arith.constant 0 : index
      %c0_8 = arith.constant 0 : index
      %10 = vector.load %arg3[%c0_7, %c0_8] : memref<8x2xf32, #tpu.memory_space<vmem>>, vector<8x2xf32>
      %cst_9 = arith.constant dense<0xFF800000> : vector<2xf32>
      %11 = vector.multi_reduction <maximumf>, %10, %cst_9 [0] : vector<8x2xf32> to vector<2xf32>
      %12 = vector.shape_cast %11 : vector<2xf32> to vector<1x2xf32>
      %13 = vector.broadcast %12 : vector<1x2xf32> to vector<8x2xf32>
      %14 = arith.subf %10, %13 : vector<8x2xf32>
      %15 = math.exp %14 : vector<8x2xf32>
      %cst_10 = arith.constant dense<0.000000e+00> : vector<2xf32>
      %16 = vector.multi_reduction <add>, %15, %cst_10 [0] : vector<8x2xf32> to vector<2xf32>
      %17 = vector.shape_cast %16 : vector<2xf32> to vector<1x2xf32>
      %18 = tpu.reciprocal %17 {approx = true} : vector<1x2xf32> -> vector<1x2xf32>
      %19 = arith.mulf %17, %18 : vector<1x2xf32>
      %cst_11 = arith.constant 2.000000e+00 : f32
      %20 = vector.broadcast %cst_11 : f32 to vector<1x2xf32>
      %21 = arith.subf %20, %19 : vector<1x2xf32>
      %22 = arith.mulf %18, %21 : vector<1x2xf32>
      %23 = vector.broadcast %22 : vector<1x2xf32> to vector<8x2xf32>
      %24 = arith.mulf %15, %23 : vector<8x2xf32>
      %c0_12 = arith.constant 0 : index
      %c0_13 = arith.constant 0 : index
      %25 = vector.load %arg3[%c0_12, %c0_13] : memref<8x2xf32, #tpu.memory_space<vmem>>, vector<8x2xf32>
      tpu.vector_store %arg3[%c0_12, %c0_13], %24 {strides = array<i32>} : memref<8x2xf32, #tpu.memory_space<vmem>>, vector<8x2xf32>,
    } else {
    }
    return
  }
  func.func @transform_0(%arg0: i32) -> (i32, i32) {
    %c0_i32 = arith.constant 0 : i32
    %c0_i32_0 = arith.constant 0 : i32
    %c0_i32_1 = arith.constant 0 : i32
    return %c0_i32, %c0_i32_0 : i32, i32
  }
  func.func @transform_1(%arg0: i32) -> (i32, i32, i32) {
    %c0_i32 = arith.constant 0 : i32
    %c0_i32_0 = arith.constant 0 : i32
    %c0_i32_1 = arith.constant 0 : i32
    return %arg0, %c0_i32, %c0_i32_0 : i32, i32, i32
  }
  func.func @transform_2(%arg0: i32) -> (i32, i32) {
    %c0_i32 = arith.constant 0 : i32
    %c0_i32_0 = arith.constant 0 : i32
    %c0_i32_1 = arith.constant 0 : i32
    return %c0_i32, %c0_i32_0 : i32, i32
  }
}

</mosaic_0001>

<llo_original>
// kernel: tpu_custom_call.1
$region0: #{tpu_custom_call.1}
  #allocation0 [shape = 'u32[]', space=smem, size = 0x4, offset = 0x4, fixed_abs, tag = 'smem constant byte address 0x4 - core index']
  #allocation1 [shape = 'u32[144,128]{1,0:T(1,128)}', space=vmem, size = 0x12000, scoped, tag = 'internal scratch']
  %s0 = inlined_call_operand.hbm [shape: f32[2,32], index: 0, kind: input, shape index: {}]
  %s1 = inlined_call_operand.hbm [shape: f32[8,2,32], index: 1, kind: input, shape index: {}]
  %s2 = inlined_call_operand.vmem [shape: f32[8,2], index: 2, kind: output, shape index: {}]
  %s3 = sld [smem:[#allocation0]]
  $region30: #{tpu_custom_call.1} parent=0
    _
  %s5 = ssub.s32 1, %s3
  %s6 = scalar_select 0, %s5, %s3
  $region1: #{tpu_custom_call.1} parent=0
    #allocation2 [shape = 'u8[1024]{0}', space=vmem, size = 0x400, scoped, tag = 'input window, operand 0, single buffered']
    #allocation3 [shape = 's32[1]{0}', space=sflag, size = 0x4, scoped, tag = 'scoped memory for tpu_custom_call.1']
    #allocation4 [shape = 'u8[8192]{0}', space=vmem, size = 0x2000, scoped, tag = 'input window, operand 1, single buffered']
    #allocation5 [shape = 's32[1]{0}', space=sflag, size = 0x4, scoped, tag = 'scoped memory for tpu_custom_call.1']
    %7 = vsyncpa [#allocation3], 0
    %8 = vsyncpa [#allocation5], 0
    // Predicated region
    $region2: #{tpu_custom_call.1} parent=1 // pred_check
      _
    $region3: #{tpu_custom_call.1} parent=1 // pred_check_branch
      %10 = sbr.rel (0) target = $region5
    $region4: #{tpu_custom_call.1} parent=1 // pred_region
      %s12 = ssub.s32 32, 32
      %13 = vsyncadd [#allocation3], %s12
      %s15 = sshll.u32 [#allocation2], 4
      %s16 = int_to_ptr.vmem [resolvable:$true] %s15
      %18 = dma.hbm_to_vmem [thread:$0]  %s0, 32, %s16, [#allocation3]
    $region5: #{tpu_custom_call.1} parent=1 // pred_fallthru
      _
    // Predicated region
    $region6: #{tpu_custom_call.1} parent=1 // pred_check
      _
    $region7: #{tpu_custom_call.1} parent=1 // pred_check_branch
      %20 = sbr.rel (0) target = $region9
    $region8: #{tpu_custom_call.1} parent=1 // pred_region
      %s22 = ssub.s32 256, 256
      %23 = vsyncadd [#allocation5], %s22
      %s24 = sshll.u32 [#allocation4], 4
      %s25 = int_to_ptr.vmem [resolvable:$true] %s24
      %30 = dma.hbm_to_vmem [thread:$0]  %s1, 256, %s25, [#allocation5], 32, 32, 2
    $region9: #{tpu_custom_call.1} parent=1 // pred_fallthru
      _
    // Predicated region
    $region10: #{tpu_custom_call.1} parent=1 // pred_check
      _
    $region11: #{tpu_custom_call.1} parent=1 // pred_check_branch
      %32 = sbr.rel (0) target = $region13
    $region12: #{tpu_custom_call.1} parent=1 // pred_region
      %33 = dma.done [#allocation3], 32
    $region13: #{tpu_custom_call.1} parent=1 // pred_fallthru
      _
    // Predicated region
    $region14: #{tpu_custom_call.1} parent=1 // pred_check
      _
    $region15: #{tpu_custom_call.1} parent=1 // pred_check_branch
      %35 = sbr.rel (0) target = $region17
    $region16: #{tpu_custom_call.1} parent=1 // pred_region
      %36 = dma.done [#allocation5], 256
    $region17: #{tpu_custom_call.1} parent=1 // pred_fallthru
      _
    %v37 = vld [vmem:[#allocation4] sm:$0x3]
    %v38 = vld [vmem:[#allocation4 + $0x2] sm:$0x3]
    %v39 = vld [vmem:[#allocation4 + $0x4] sm:$0x3]
    %v40 = vld [vmem:[#allocation4 + $0x6] sm:$0x3]
    %v41 = vld [vmem:[#allocation4 + $0x8] sm:$0x3]
    %v42 = vld [vmem:[#allocation4 + $0xa] sm:$0x3]
    %v43 = vld [vmem:[#allocation4 + $0xc] sm:$0x3]
    %v44 = vld [vmem:[#allocation4 + $0xe] sm:$0x3]
    %v45 = vld [vmem:[#allocation2] sm:$0x3]
    %v46 = vmul.f32 %v37, %v45
    %v47 = vmul.f32 %v38, %v45
    %v48 = vmul.f32 %v39, %v45
    %v49 = vmul.f32 %v40, %v45
    %v50 = vmul.f32 %v41, %v45
    %v51 = vmul.f32 %v42, %v45
    %v52 = vmul.f32 %v43, %v45
    %v53 = vmul.f32 %v44, %v45
    %vm54 = vcmask 254976
    %v55 = vsel %vm54, %v46, 0.0
    %56 = vadd.xlane.f32.xlu0 %v55
    %v57 = vpop.xlane.xlu0 %56
    %v58 = vsel %vm54, %v47, 0.0
    %59 = vadd.xlane.f32.xlu0 %v58
    %v60 = vpop.xlane.xlu0 %59
    %v61 = vsel %vm54, %v48, 0.0
    %62 = vadd.xlane.f32.xlu0 %v61
    %v63 = vpop.xlane.xlu0 %62
    %v64 = vsel %vm54, %v49, 0.0
    %65 = vadd.xlane.f32.xlu0 %v64
    %v66 = vpop.xlane.xlu0 %65
    %v67 = vsel %vm54, %v50, 0.0
    %68 = vadd.xlane.f32.xlu0 %v67
    %v69 = vpop.xlane.xlu0 %68
    %v70 = vsel %vm54, %v51, 0.0
    %71 = vadd.xlane.f32.xlu0 %v70
    %v72 = vpop.xlane.xlu0 %71
    %v73 = vsel %vm54, %v52, 0.0
    %74 = vadd.xlane.f32.xlu0 %v73
    %v75 = vpop.xlane.xlu0 %74
    %v76 = vsel %vm54, %v53, 0.0
    %77 = vadd.xlane.f32.xlu0 %v76
    %v78 = vpop.xlane.xlu0 %77
    %v87 = vlaneseq
    %v88 = vand.u32 %v87, 127
    %v89 = vlaneseq
    %v90 = vshrl.u32 %v89, 7
    %v91 = vsub.s32 %v88, %v90
    %v92 = vrot.slane %v57, %v91
    %v93 = vlaneseq
    %v94 = vshrl.u32 %v93, 7
    %v95 = vsub.s32 %v88, %v94
    %v96 = vrot.slane %v60, %v95
    %v97 = vlaneseq
    %v98 = vshrl.u32 %v97, 7
    %v99 = vsub.s32 %v88, %v98
    %v100 = vrot.slane %v63, %v99
    %v101 = vlaneseq
    %v102 = vshrl.u32 %v101, 7
    %v103 = vsub.s32 %v88, %v102
    %v104 = vrot.slane %v66, %v103
    %v105 = vlaneseq
    %v106 = vshrl.u32 %v105, 7
    %v107 = vsub.s32 %v88, %v106
    %v108 = vrot.slane %v69, %v107
    %v109 = vlaneseq
    %v110 = vshrl.u32 %v109, 7
    %v111 = vsub.s32 %v88, %v110
    %v112 = vrot.slane %v72, %v111
    %v113 = vlaneseq
    %v114 = vshrl.u32 %v113, 7
    %v115 = vsub.s32 %v88, %v114
    %v116 = vrot.slane %v75, %v115
    %v117 = vlaneseq
    %v118 = vshrl.u32 %v117, 7
    %v119 = vsub.s32 %v88, %v118
    %v120 = vrot.slane %v78, %v119
    %vm121 = vcmask 1041409
    %v122 = vsel %vm121, %v96, %v92
    %vm123 = vcmask 1042434
    %v124 = vsel %vm123, %v100, %v122
    %vm125 = vcmask 1043459
    %v126 = vsel %vm125, %v104, %v124
    %vm127 = vcmask 1044484
    %v128 = vsel %vm127, %v108, %v126
    %vm129 = vcmask 1045509
    %v130 = vsel %vm129, %v112, %v128
    %vm131 = vcmask 1046534
    %v132 = vsel %vm131, %v116, %v130
    %vm133 = vcmask 1047559
    %v134 = vsel %vm133, %v120, %v132
    %vm136 = vcmask 15360
    %137 = vst.msk [vmem:[%s2] sm:$0xff] %vm136, %v134
    %p138 = scmp.eq.s32.totalorder 0, 0
    // Predicated region
    $region18: #{tpu_custom_call.1} parent=1 // pred_check
      %p139 = pneg %p138
    $region19: #{tpu_custom_call.1} parent=1 // pred_check_branch
      %141 = sbr.rel (%p139) target = $region21
    $region20: #{tpu_custom_call.1} parent=1 // pred_region
      %v142 = vld [vmem:[%s2] sm:$0xff]
      %v143 = vsel %vm136, %v142, -inf
      %v144 = vrot.slane %v143, 4
      %v145 = vmax.f32 %v143, %v144
      %v146 = vrot.slane %v145, 2
      %v147 = vmax.f32 %v145, %v146
      %v148 = vrot.slane %v147, 1
      %v149 = vmax.f32 %v147, %v148
      %v150 = vsub.f32 %v142, %v149
      %v151 = vmul.f32 %v150, 1.442695
      %v152 = vpow.pop %v151
      %v153 = vsel %vm136, %v152, 0.0
      %v154 = vrot.slane %v153, 4
      %v155 = vadd.f32 %v153, %v154
      %v156 = vrot.slane %v155, 2
      %v157 = vadd.f32 %v155, %v156
      %v158 = vrot.slane %v157, 1
      %v159 = vadd.f32 %v157, %v158
      %v160 = vrcp.pop %v159
      %v161 = vmul.f32 %v159, %v160
      %v162 = vsub.f32 2.0, %v161
      %v163 = vmul.f32 %v160, %v162
      %v164 = vmul.f32 %v152, %v163
      %165 = vst.msk [vmem:[%s2] sm:$0xff] %vm136, %v164
    $region21: #{tpu_custom_call.1} parent=1 // pred_fallthru
      _
    // Predicated region
    $region22: #{tpu_custom_call.1} parent=1 // pred_check
      _
    $region23: #{tpu_custom_call.1} parent=1 // pred_check_branch
      %167 = sbr.rel (0) target = $region25
    $region24: #{tpu_custom_call.1} parent=1 // pred_region
      _
    $region25: #{tpu_custom_call.1} parent=1 // pred_fallthru
      _
    // Predicated region
    $region26: #{tpu_custom_call.1} parent=1 // pred_check
      _
    $region27: #{tpu_custom_call.1} parent=1 // pred_check_branch
      %169 = sbr.rel (0) target = $region29
    $region28: #{tpu_custom_call.1} parent=1 // pred_region
      _
    $region29: #{tpu_custom_call.1} parent=1 // pred_fallthru
      _
    %170 = vsyncpa [#allocation3], 1
    %171 = vsyncpa [#allocation5], 1

</llo_original>
